<compile_context>
chip_gen: v7x
topology: tpu7x:2x2x1
jax: 0.10.0
libtpu: 0.0.40
codegen_flags: <defaults>
</compile_context>

<pallas_src>
import functools

import jax
import jax.numpy as jnp
from jax import lax
from jax.experimental import pallas as pl
from jax.experimental.pallas import tpu as pltpu


# ---------------------------------------------------------------------------
# Reference helpers (plain JAX) — used for the tiny label loss and self-check.
# ---------------------------------------------------------------------------
def _bce_logits_ref(x, y):
    # Numerically stable BCE-with-logits, identical to
    # torch.nn.BCEWithLogitsLoss(reduction='none').
    return jnp.maximum(x, 0.0) - x * y + jnp.log1p(jnp.exp(-jnp.abs(x)))


# ---------------------------------------------------------------------------
# Pallas kernel: all five map/volume reductions in one pass over the data.
# ---------------------------------------------------------------------------
def _map_losses_kernel(out_map_ref, out_vol_ref, mask_ref,           # inputs
                       mm_out, vm_out, cons_out, me_out, ve_out,     # outputs
                       mm_acc, vm_acc, cons_acc, me_acc, ve_acc,     # scratch
                       *, hw_valid, tile_hw, needs_valid):
    b = pl.program_id(0)
    s = pl.program_id(1)

    # -- init accumulators on the very first grid step ----------------------
    @pl.when(jnp.logical_and(b == 0, s == 0))
    def _init():
        mm_acc[...] = jnp.zeros_like(mm_acc)
        vm_acc[...] = jnp.zeros_like(vm_acc)
        cons_acc[...] = jnp.zeros_like(cons_acc)
        me_acc[...] = jnp.zeros_like(me_acc)
        ve_acc[...] = jnp.zeros_like(ve_acc)

    om = out_map_ref[0].astype(jnp.float32)      # (C, TILE)
    ov = out_vol_ref[0].astype(jnp.float32)      # (C, TILE)
    mk = mask_ref[0].astype(jnp.float32)         # (1, TILE) -> broadcast over C

    def _parts(x):
        # One exp, one log1p, one approx-reciprocal per tensor; reused by the
        # mask BCE, the entropy BCE and the consistency term.
        e = jnp.exp(-jnp.abs(x))                       # EUP exp
        softplus = jnp.log1p(e)                        # EUP log
        relu = jnp.maximum(x, 0.0)                     # VPU
        recip = pl.reciprocal(1.0 + e, approx=True)    # EUP vrcp (cheap)
        sig = jnp.where(x >= 0, recip, e * recip)      # sigmoid(x)
        return relu, softplus, sig

    relu_m, sp_m, sig_m = _parts(om)
    relu_v, sp_v, sig_v = _parts(ov)

    mm = relu_m - om * mk + sp_m                 # BCE(out_map, mask)
    vm = relu_v - ov * mk + sp_v                 # BCE(out_vol, mask)
    diff = sig_v - sig_m
    cons = diff * diff                           # MSE(sigmoid, sigmoid)
    me = relu_m - om * sig_m + sp_m              # binary entropy(out_map)
    ve = relu_v - ov * sig_v + sp_v              # binary entropy(out_vol)

    if needs_valid:
        # Spatial axis was zero-padded up to a tile multiple: mask the tail.
        col = s * tile_hw + lax.broadcasted_iota(jnp.int32, om.shape, 1)
        valid = (col < hw_valid).astype(jnp.float32)
        mm = mm * valid
        vm = vm * valid
        cons = cons * valid
        me = me * valid
        ve = ve * valid

    # Pure VPU accumulation (no per-tile cross-lane reduction).
    mm_acc[...] += mm
    vm_acc[...] += vm
    cons_acc[...] += cons
    me_acc[...] += me
    ve_acc[...] += ve

    # -- single cross-lane reduction + writeback at the very last step ------
    @pl.when(jnp.logical_and(b == pl.num_programs(0) - 1,
                             s == pl.num_programs(1) - 1))
    def _finalize():
        mm_out[...] = jnp.sum(mm_acc[...]).reshape(1, 1)
        vm_out[...] = jnp.sum(vm_acc[...]).reshape(1, 1)
        cons_out[...] = jnp.sum(cons_acc[...]).reshape(1, 1)
        me_out[...] = jnp.sum(me_acc[...]).reshape(1, 1)
        ve_out[...] = jnp.sum(ve_acc[...]).reshape(1, 1)


def _run_map_losses(out_map, out_vol, mask, *, max_block_bytes=2 * 1024 * 1024):
    """Returns sums of the 5 map/volume losses over all B*C*H*W elements."""
    B, C, H, W = out_map.shape
    HW = H * W

    om = out_map.reshape(B, C, HW)
    ov = out_vol.reshape(B, C, HW)
    # Mask is (B, 1, H, W) (or (B, H, W)): keep it un-replicated; the kernel
    # broadcasts it over C.  Original dtype is preserved (cast in-kernel).
    mk = mask.reshape(B, 1, HW)
    # TODO(synk): masks shaped (B, C, H, W) (per-channel) are not handled.

    # Lane-dense spatial tile, multiple of 128, per-input block <= ~2 MiB.
    hw_aligned = ((HW + 127) // 128) * 128
    tile = max(128, min(hw_aligned, ((max_block_bytes // (C * 4)) // 128) * 128))
    hwp = ((HW + tile - 1) // tile) * tile
    if hwp != HW:
        pad = ((0, 0), (0, 0), (0, hwp - HW))
        om = jnp.pad(om, pad)
        ov = jnp.pad(ov, pad)
        mk = jnp.pad(mk, pad)
    s_tiles = hwp // tile

    kernel = functools.partial(
        _map_losses_kernel, hw_valid=HW, tile_hw=tile, needs_valid=(hwp != HW))

    scal = jax.ShapeDtypeStruct((1, 1), jnp.float32)
    data_spec = pl.BlockSpec((1, C, tile), lambda b, s: (b, 0, s))
    mask_spec = pl.BlockSpec((1, 1, tile), lambda b, s: (b, 0, s))
    out_spec = pl.BlockSpec((1, 1), lambda b, s: (0, 0))

    return pl.pallas_call(
        kernel,
        out_shape=(scal,) * 5,
        grid=(B, s_tiles),
        in_specs=[data_spec, data_spec, mask_spec],
        out_specs=(out_spec,) * 5,
        scratch_shapes=[pltpu.VMEM((C, tile), jnp.float32) for _ in range(5)],
        compiler_params=pltpu.CompilerParams(
            dimension_semantics=("arbitrary", "arbitrary"),
            vmem_limit_bytes=32 * 1024 * 1024),
    )(om, ov, mk)


# ---------------------------------------------------------------------------
# Module wrapper: mirrors Loss.forward control flow exactly.
# ---------------------------------------------------------------------------
class LossPallas:
    """JAX/Pallas port of losses.loss.Loss with fixed concrete sub-losses."""

    def __init__(self,
                 map_label_weight=1.0, volume_label_weight=0.5,
                 map_mask_weight=1.0, volume_mask_weight=0.5,
                 consistency_weight=0.1,
                 map_entropy_weight=0.01, volume_entropy_weight=0.01,
                 consistency_source='self'):
        self.map_label_weight = map_label_weight
        self.volume_label_weight = volume_label_weight
        self.map_mask_weight = map_mask_weight
        self.volume_mask_weight = volume_mask_weight
        self.consistency_weight = consistency_weight
        self.map_entropy_weight = map_entropy_weight
        self.volume_entropy_weight = volume_entropy_weight
        self.consistency_source = consistency_source

    def __call__(self, output, label, mask):
        label = label.astype(jnp.float32)

        out_map = output['out_map']
        out_vol = output['out_vol']
        B, C, H, W = out_map.shape

        mm_s, vm_s, cons_s, me_s, ve_s = _run_map_losses(out_map, out_vol, mask)

        # (B, C) label BCE: a few hundred elements — plain JAX is cheaper than
        # a second pallas_call launch.
        map_label_loss = jnp.mean(
            _bce_logits_ref(output['map_pred'].astype(jnp.float32), label))
        vol_label_loss = jnp.mean(
            _bce_logits_ref(output['vol_pred'].astype(jnp.float32), label))

        n_map = float(B * C * H * W)
        map_mask_loss = mm_s[0, 0] / n_map
        vol_mask_loss = vm_s[0, 0] / n_map
        consistency_loss = cons_s[0, 0] / n_map
        map_entropy_loss = me_s[0, 0] / n_map
        vol_entropy_loss = ve_s[0, 0] / n_map

        # --- weighted combination: mirrors Loss.forward control flow ---
        total_loss = 0.0
        loss_dict = {}

        total_loss = total_loss + self.map_label_weight * map_label_loss
        loss_dict['map_label_loss'] = map_label_loss

        if self.volume_label_weight != 0.0:
            total_loss = total_loss + self.volume_label_weight * vol_label_loss
            loss_dict['vol_label_loss'] = vol_label_loss

        total_loss = total_loss + self.map_mask_weight * map_mask_loss
        loss_dict['map_mask_loss'] = map_mask_loss

        if self.volume_mask_weight != 0.0:
            total_loss = total_loss + self.volume_mask_weight * vol_mask_loss
            loss_dict['vol_mask_loss'] = vol_mask_loss

        if self.consistency_weight != 0.0 and self.consistency_source == 'self':
            total_loss = total_loss + self.consistency_weight * consistency_loss
            loss_dict['consistency_loss'] = consistency_loss

        if self.map_entropy_weight != 0.0:
            total_loss = total_loss + self.map_entropy_weight * map_entropy_loss
            loss_dict['map_entropy_loss'] = map_entropy_loss

        if self.volume_entropy_weight != 0:
            total_loss = total_loss + self.volume_entropy_weight * vol_entropy_loss
            loss_dict['vol_entropy_loss'] = vol_entropy_loss

        loss_dict['total_loss'] = total_loss
        return loss_dict


# ---------------------------------------------------------------------------
# Pure-JAX reference (for a loose sanity check; approx reciprocal in-kernel
# makes this a ~1e-3-relative comparison, not bit-exact).
# ---------------------------------------------------------------------------
def _reference_total(loss_mod, output, label, mask):
    label = label.astype(jnp.float32)
    om = output['out_map'].astype(jnp.float32)
    ov = output['out_vol'].astype(jnp.float32)
    mk = jnp.broadcast_to(mask.astype(jnp.float32), om.shape)
    pm, pv = jax.nn.sigmoid(om), jax.nn.sigmoid(ov)

    ml = jnp.mean(_bce_logits_ref(output['map_pred'].astype(jnp.float32), label))
    vl = jnp.mean(_bce_logits_ref(output['vol_pred'].astype(jnp.float32), label))
    mm = jnp.mean(_bce_logits_ref(om, mk))
    vm = jnp.mean(_bce_logits_ref(ov, mk))
    cons = jnp.mean((pv - pm) ** 2)
    me = jnp.mean(_bce_logits_ref(om, pm))
    ve = jnp.mean(_bce_logits_ref(ov, pv))

    return (loss_mod.map_label_weight * ml
            + loss_mod.volume_label_weight * vl
            + loss_mod.map_mask_weight * mm
            + loss_mod.volume_mask_weight * vm
            + loss_mod.consistency_weight * cons
            + loss_mod.map_entropy_weight * me
            + loss_mod.volume_entropy_weight * ve)


if __name__ == "__main__":
    key = jax.random.PRNGKey(0)
    kmp, kvp, kom, kov, klb, kmk = jax.random.split(key, 6)

    B, C, H, W = 2, 4, 16, 16  # NCHW, matches PyTorch convention

    output = {
        'map_pred': jax.random.normal(kmp, (B, C), jnp.float32),
        'vol_pred': jax.random.normal(kvp, (B, C), jnp.float32),
        'out_map': jax.random.normal(kom, (B, C, H, W), jnp.float32),
        'out_vol': jax.random.normal(kov, (B, C, H, W), jnp.float32),
    }
    label = jax.random.bernoulli(klb, 0.5, (B, C)).astype(jnp.float32)
    mask = jax.random.bernoulli(kmk, 0.3, (B, 1, H, W)).astype(jnp.float32)

    loss_mod = LossPallas()
    loss_dict = loss_mod(output, label, mask)
    total = jax.block_until_ready(loss_dict['total_loss'])

    # sanity: finite and close to the pure-JAX reference (loose tolerance
    # because the kernel uses the hardware approx reciprocal for sigmoid).
    assert bool(jnp.isfinite(total))
    ref_total = _reference_total(loss_mod, output, label, mask)
    assert bool(jnp.allclose(total, ref_total, rtol=2e-2, atol=1e-3))

    print("KERNEL_OK")
</pallas_src>

<mosaic_0001>
module attributes {stable_mosaic.version = 11 : i64} {
  func.func @_map_losses_kernel(%arg0: i32, %arg1: i32, %arg2: memref<1x4x256xf32, #tpu.memory_space<vmem>>, %arg3: memref<1x4x256xf32, #tpu.memory_space<vmem>>, %arg4: memref<1x1x256xf32, #tpu.memory_space<vmem>>, %arg5: memref<1x1xf32, #tpu.memory_space<vmem>>, %arg6: memref<1x1xf32, #tpu.memory_space<vmem>>, %arg7: memref<1x1xf32, #tpu.memory_space<vmem>>, %arg8: memref<1x1xf32, #tpu.memory_space<vmem>>, %arg9: memref<1x1xf32, #tpu.memory_space<vmem>>, %arg10: memref<4x256xf32, #tpu.memory_space<vmem>>, %arg11: memref<4x256xf32, #tpu.memory_space<vmem>>, %arg12: memref<4x256xf32, #tpu.memory_space<vmem>>, %arg13: memref<4x256xf32, #tpu.memory_space<vmem>>, %arg14: memref<4x256xf32, #tpu.memory_space<vmem>>) attributes {dimension_semantics = [#tpu.dimension_semantics<arbitrary>, #tpu.dimension_semantics<arbitrary>], iteration_bounds = array<i64: 2, 1>, scalar_prefetch = 0 : i64, scratch_operands = 5 : i64, tpu.core_type = #tpu.core_type<tc>, window_params = [{transform_indices = @transform_0, window_bounds = array<i64: 1, 4, 256>}, {transform_indices = @transform_1, window_bounds = array<i64: 1, 4, 256>}, {transform_indices = @transform_2, window_bounds = array<i64: 1, 1, 256>}, {pipeline_mode = #tpu.pipeline_mode<synchronous>, transform_indices = @transform_3, window_bounds = array<i64: 1, 1>}, {pipeline_mode = #tpu.pipeline_mode<synchronous>, transform_indices = @transform_4, window_bounds = array<i64: 1, 1>}, {pipeline_mode = #tpu.pipeline_mode<synchronous>, transform_indices = @transform_5, window_bounds = array<i64: 1, 1>}, {pipeline_mode = #tpu.pipeline_mode<synchronous>, transform_indices = @transform_6, window_bounds = array<i64: 1, 1>}, {pipeline_mode = #tpu.pipeline_mode<synchronous>, transform_indices = @transform_7, window_bounds = array<i64: 1, 1>}]} {
    %c0_i32 = arith.constant 0 : i32
    %0 = arith.cmpi eq, %arg0, %c0_i32 : i32
    %c0_i32_0 = arith.constant 0 : i32
    %1 = arith.cmpi eq, %arg1, %c0_i32_0 : i32
    %2 = arith.andi %0, %1 : i1
    %3 = arith.extui %2 : i1 to i32
    %c0_i32_1 = arith.constant 0 : i32
    %4 = arith.cmpi ne, %3, %c0_i32_1 : i32
    scf.if %4 {
      %cst_39 = arith.constant 0.000000e+00 : f32
      %75 = vector.broadcast %cst_39 : f32 to vector<4x256xf32>
      %c0_40 = arith.constant 0 : index
      %c0_41 = arith.constant 0 : index
      %76 = vector.load %arg10[%c0_40, %c0_41] : memref<4x256xf32, #tpu.memory_space<vmem>>, vector<4x256xf32>
      tpu.vector_store %arg10[%c0_40, %c0_41], %75 {strides = array<i32>} : memref<4x256xf32, #tpu.memory_space<vmem>>, vector<4x256xf32>,
      %cst_42 = arith.constant 0.000000e+00 : f32
      %77 = vector.broadcast %cst_42 : f32 to vector<4x256xf32>
      %c0_43 = arith.constant 0 : index
      %c0_44 = arith.constant 0 : index
      %78 = vector.load %arg11[%c0_43, %c0_44] : memref<4x256xf32, #tpu.memory_space<vmem>>, vector<4x256xf32>
      tpu.vector_store %arg11[%c0_43, %c0_44], %77 {strides = array<i32>} : memref<4x256xf32, #tpu.memory_space<vmem>>, vector<4x256xf32>,
      %cst_45 = arith.constant 0.000000e+00 : f32
      %79 = vector.broadcast %cst_45 : f32 to vector<4x256xf32>
      %c0_46 = arith.constant 0 : index
      %c0_47 = arith.constant 0 : index
      %80 = vector.load %arg12[%c0_46, %c0_47] : memref<4x256xf32, #tpu.memory_space<vmem>>, vector<4x256xf32>
      tpu.vector_store %arg12[%c0_46, %c0_47], %79 {strides = array<i32>} : memref<4x256xf32, #tpu.memory_space<vmem>>, vector<4x256xf32>,
      %cst_48 = arith.constant 0.000000e+00 : f32
      %81 = vector.broadcast %cst_48 : f32 to vector<4x256xf32>
      %c0_49 = arith.constant 0 : index
      %c0_50 = arith.constant 0 : index
      %82 = vector.load %arg13[%c0_49, %c0_50] : memref<4x256xf32, #tpu.memory_space<vmem>>, vector<4x256xf32>
      tpu.vector_store %arg13[%c0_49, %c0_50], %81 {strides = array<i32>} : memref<4x256xf32, #tpu.memory_space<vmem>>, vector<4x256xf32>,
      %cst_51 = arith.constant 0.000000e+00 : f32
      %83 = vector.broadcast %cst_51 : f32 to vector<4x256xf32>
      %c0_52 = arith.constant 0 : index
      %c0_53 = arith.constant 0 : index
      %84 = vector.load %arg14[%c0_52, %c0_53] : memref<4x256xf32, #tpu.memory_space<vmem>>, vector<4x256xf32>
      tpu.vector_store %arg14[%c0_52, %c0_53], %83 {strides = array<i32>} : memref<4x256xf32, #tpu.memory_space<vmem>>, vector<4x256xf32>,
    } else {
    }
    %c0 = arith.constant 0 : index
    %c0_2 = arith.constant 0 : index
    %c0_3 = arith.constant 0 : index
    %5 = vector.load %arg2[%c0, %c0_2, %c0_3] : memref<1x4x256xf32, #tpu.memory_space<vmem>>, vector<1x4x256xf32>
    %6 = vector.shape_cast %5 : vector<1x4x256xf32> to vector<4x256xf32>
    %c0_4 = arith.constant 0 : index
    %c0_5 = arith.constant 0 : index
    %c0_6 = arith.constant 0 : index
    %7 = vector.load %arg3[%c0_4, %c0_5, %c0_6] : memref<1x4x256xf32, #tpu.memory_space<vmem>>, vector<1x4x256xf32>
    %8 = vector.shape_cast %7 : vector<1x4x256xf32> to vector<4x256xf32>
    %c0_7 = arith.constant 0 : index
    %c0_8 = arith.constant 0 : index
    %c0_9 = arith.constant 0 : index
    %9 = vector.load %arg4[%c0_7, %c0_8, %c0_9] : memref<1x1x256xf32, #tpu.memory_space<vmem>>, vector<1x1x256xf32>
    %10 = vector.shape_cast %9 : vector<1x1x256xf32> to vector<1x256xf32>
    %11 = math.absf %6 : vector<4x256xf32>
    %cst = arith.constant 0.000000e+00 : f32
    %12 = vector.broadcast %cst : f32 to vector<4x256xf32>
    %13 = arith.subf %12, %11 : vector<4x256xf32>
    %14 = math.exp %13 : vector<4x256xf32>
    %15 = math.log1p %14 : vector<4x256xf32>
    %cst_10 = arith.constant 0.000000e+00 : f32
    %16 = vector.broadcast %cst_10 : f32 to vector<4x256xf32>
    %17 = arith.maximumf %6, %16 : vector<4x256xf32>
    %cst_11 = arith.constant 1.000000e+00 : f32
    %18 = vector.broadcast %cst_11 : f32 to vector<4x256xf32>
    %19 = arith.addf %18, %14 : vector<4x256xf32>
    %20 = tpu.reciprocal %19 {approx = true} : vector<4x256xf32> -> vector<4x256xf32>
    %cst_12 = arith.constant 0.000000e+00 : f32
    %21 = vector.broadcast %cst_12 : f32 to vector<4x256xf32>
    %22 = arith.cmpf oge, %6, %21 : vector<4x256xf32>
    %23 = arith.mulf %14, %20 : vector<4x256xf32>
    %24 = arith.select %22, %20, %23 : vector<4x256xi1>, vector<4x256xf32>
    %25 = math.absf %8 : vector<4x256xf32>
    %cst_13 = arith.constant 0.000000e+00 : f32
    %26 = vector.broadcast %cst_13 : f32 to vector<4x256xf32>
    %27 = arith.subf %26, %25 : vector<4x256xf32>
    %28 = math.exp %27 : vector<4x256xf32>
    %29 = math.log1p %28 : vector<4x256xf32>
    %cst_14 = arith.constant 0.000000e+00 : f32
    %30 = vector.broadcast %cst_14 : f32 to vector<4x256xf32>
    %31 = arith.maximumf %8, %30 : vector<4x256xf32>
    %cst_15 = arith.constant 1.000000e+00 : f32
    %32 = vector.broadcast %cst_15 : f32 to vector<4x256xf32>
    %33 = arith.addf %32, %28 : vector<4x256xf32>
    %34 = tpu.reciprocal %33 {approx = true} : vector<4x256xf32> -> vector<4x256xf32>
    %cst_16 = arith.constant 0.000000e+00 : f32
    %35 = vector.broadcast %cst_16 : f32 to vector<4x256xf32>
    %36 = arith.cmpf oge, %8, %35 : vector<4x256xf32>
    %37 = arith.mulf %28, %34 : vector<4x256xf32>
    %38 = arith.select %36, %34, %37 : vector<4x256xi1>, vector<4x256xf32>
    %39 = vector.broadcast %10 : vector<1x256xf32> to vector<4x256xf32>
    %40 = arith.mulf %6, %39 : vector<4x256xf32>
    %41 = arith.subf %17, %40 : vector<4x256xf32>
    %42 = arith.addf %41, %15 : vector<4x256xf32>
    %43 = vector.broadcast %10 : vector<1x256xf32> to vector<4x256xf32>
    %44 = arith.mulf %8, %43 : vector<4x256xf32>
    %45 = arith.subf %31, %44 : vector<4x256xf32>
    %46 = arith.addf %45, %29 : vector<4x256xf32>
    %47 = arith.subf %38, %24 : vector<4x256xf32>
    %48 = arith.mulf %47, %47 : vector<4x256xf32>
    %49 = arith.mulf %6, %24 : vector<4x256xf32>
    %50 = arith.subf %17, %49 : vector<4x256xf32>
    %51 = arith.addf %50, %15 : vector<4x256xf32>
    %52 = arith.mulf %8, %38 : vector<4x256xf32>
    %53 = arith.subf %31, %52 : vector<4x256xf32>
    %54 = arith.addf %53, %29 : vector<4x256xf32>
    %c0_17 = arith.constant 0 : index
    %c0_18 = arith.constant 0 : index
    %55 = vector.load %arg10[%c0_17, %c0_18] : memref<4x256xf32, #tpu.memory_space<vmem>>, vector<4x256xf32>
    %56 = arith.addf %55, %42 : vector<4x256xf32>
    %c0_19 = arith.constant 0 : index
    %c0_20 = arith.constant 0 : index
    %57 = vector.load %arg10[%c0_19, %c0_20] : memref<4x256xf32, #tpu.memory_space<vmem>>, vector<4x256xf32>
    tpu.vector_store %arg10[%c0_19, %c0_20], %56 {strides = array<i32>} : memref<4x256xf32, #tpu.memory_space<vmem>>, vector<4x256xf32>,
    %c0_21 = arith.constant 0 : index
    %c0_22 = arith.constant 0 : index
    %58 = vector.load %arg11[%c0_21, %c0_22] : memref<4x256xf32, #tpu.memory_space<vmem>>, vector<4x256xf32>
    %59 = arith.addf %58, %46 : vector<4x256xf32>
    %c0_23 = arith.constant 0 : index
    %c0_24 = arith.constant 0 : index
    %60 = vector.load %arg11[%c0_23, %c0_24] : memref<4x256xf32, #tpu.memory_space<vmem>>, vector<4x256xf32>
    tpu.vector_store %arg11[%c0_23, %c0_24], %59 {strides = array<i32>} : memref<4x256xf32, #tpu.memory_space<vmem>>, vector<4x256xf32>,
    %c0_25 = arith.constant 0 : index
    %c0_26 = arith.constant 0 : index
    %61 = vector.load %arg12[%c0_25, %c0_26] : memref<4x256xf32, #tpu.memory_space<vmem>>, vector<4x256xf32>
    %62 = arith.addf %61, %48 : vector<4x256xf32>
    %c0_27 = arith.constant 0 : index
    %c0_28 = arith.constant 0 : index
    %63 = vector.load %arg12[%c0_27, %c0_28] : memref<4x256xf32, #tpu.memory_space<vmem>>, vector<4x256xf32>
    tpu.vector_store %arg12[%c0_27, %c0_28], %62 {strides = array<i32>} : memref<4x256xf32, #tpu.memory_space<vmem>>, vector<4x256xf32>,
    %c0_29 = arith.constant 0 : index
    %c0_30 = arith.constant 0 : index
    %64 = vector.load %arg13[%c0_29, %c0_30] : memref<4x256xf32, #tpu.memory_space<vmem>>, vector<4x256xf32>
    %65 = arith.addf %64, %51 : vector<4x256xf32>
    %c0_31 = arith.constant 0 : index
    %c0_32 = arith.constant 0 : index
    %66 = vector.load %arg13[%c0_31, %c0_32] : memref<4x256xf32, #tpu.memory_space<vmem>>, vector<4x256xf32>
    tpu.vector_store %arg13[%c0_31, %c0_32], %65 {strides = array<i32>} : memref<4x256xf32, #tpu.memory_space<vmem>>, vector<4x256xf32>,
    %c0_33 = arith.constant 0 : index
    %c0_34 = arith.constant 0 : index
    %67 = vector.load %arg14[%c0_33, %c0_34] : memref<4x256xf32, #tpu.memory_space<vmem>>, vector<4x256xf32>
    %68 = arith.addf %67, %54 : vector<4x256xf32>
    %c0_35 = arith.constant 0 : index
    %c0_36 = arith.constant 0 : index
    %69 = vector.load %arg14[%c0_35, %c0_36] : memref<4x256xf32, #tpu.memory_space<vmem>>, vector<4x256xf32>
    tpu.vector_store %arg14[%c0_35, %c0_36], %68 {strides = array<i32>} : memref<4x256xf32, #tpu.memory_space<vmem>>, vector<4x256xf32>,
    %c1_i32 = arith.constant 1 : i32
    %70 = arith.cmpi eq, %arg0, %c1_i32 : i32
    %c0_i32_37 = arith.constant 0 : i32
    %71 = arith.cmpi eq, %arg1, %c0_i32_37 : i32
    %72 = arith.andi %70, %71 : i1
    %73 = arith.extui %72 : i1 to i32
    %c0_i32_38 = arith.constant 0 : i32
    %74 = arith.cmpi ne, %73, %c0_i32_38 : i32
    scf.if %74 {
      %c0_39 = arith.constant 0 : index
      %c0_40 = arith.constant 0 : index
      %75 = vector.load %arg10[%c0_39, %c0_40] : memref<4x256xf32, #tpu.memory_space<vmem>>, vector<4x256xf32>
      %76 = vector.shape_cast %75 : vector<4x256xf32> to vector<1x4x256xf32>
      %cst_41 = arith.constant dense<0.000000e+00> : vector<1xf32>
      %77 = vector.multi_reduction <add>, %76, %cst_41 [1, 2] : vector<1x4x256xf32> to vector<1xf32>
      %78 = vector.shape_cast %77 : vector<1xf32> to vector<1x1x1xf32>
      %79 = vector.extract %78[0, 0, 0] : f32 from vector<1x1x1xf32>
      %80 = vector.broadcast %79 : f32 to vector<1x1xf32>
      %c0_42 = arith.constant 0 : index
      %c0_43 = arith.constant 0 : index
      %81 = vector.load %arg5[%c0_42, %c0_43] : memref<1x1xf32, #tpu.memory_space<vmem>>, vector<1x1xf32>
      tpu.vector_store %arg5[%c0_42, %c0_43], %80 {strides = array<i32>} : memref<1x1xf32, #tpu.memory_space<vmem>>, vector<1x1xf32>,
      %c0_44 = arith.constant 0 : index
      %c0_45 = arith.constant 0 : index
      %82 = vector.load %arg11[%c0_44, %c0_45] : memref<4x256xf32, #tpu.memory_space<vmem>>, vector<4x256xf32>
      %83 = vector.shape_cast %82 : vector<4x256xf32> to vector<1x4x256xf32>
      %cst_46 = arith.constant dense<0.000000e+00> : vector<1xf32>
      %84 = vector.multi_reduction <add>, %83, %cst_46 [1, 2] : vector<1x4x256xf32> to vector<1xf32>
      %85 = vector.shape_cast %84 : vector<1xf32> to vector<1x1x1xf32>
      %86 = vector.extract %85[0, 0, 0] : f32 from vector<1x1x1xf32>
      %87 = vector.broadcast %86 : f32 to vector<1x1xf32>
      %c0_47 = arith.constant 0 : index
      %c0_48 = arith.constant 0 : index
      %88 = vector.load %arg6[%c0_47, %c0_48] : memref<1x1xf32, #tpu.memory_space<vmem>>, vector<1x1xf32>
      tpu.vector_store %arg6[%c0_47, %c0_48], %87 {strides = array<i32>} : memref<1x1xf32, #tpu.memory_space<vmem>>, vector<1x1xf32>,
      %c0_49 = arith.constant 0 : index
      %c0_50 = arith.constant 0 : index
      %89 = vector.load %arg12[%c0_49, %c0_50] : memref<4x256xf32, #tpu.memory_space<vmem>>, vector<4x256xf32>
      %90 = vector.shape_cast %89 : vector<4x256xf32> to vector<1x4x256xf32>
      %cst_51 = arith.constant dense<0.000000e+00> : vector<1xf32>
      %91 = vector.multi_reduction <add>, %90, %cst_51 [1, 2] : vector<1x4x256xf32> to vector<1xf32>
      %92 = vector.shape_cast %91 : vector<1xf32> to vector<1x1x1xf32>
      %93 = vector.extract %92[0, 0, 0] : f32 from vector<1x1x1xf32>
      %94 = vector.broadcast %93 : f32 to vector<1x1xf32>
      %c0_52 = arith.constant 0 : index
      %c0_53 = arith.constant 0 : index
      %95 = vector.load %arg7[%c0_52, %c0_53] : memref<1x1xf32, #tpu.memory_space<vmem>>, vector<1x1xf32>
      tpu.vector_store %arg7[%c0_52, %c0_53], %94 {strides = array<i32>} : memref<1x1xf32, #tpu.memory_space<vmem>>, vector<1x1xf32>,
      %c0_54 = arith.constant 0 : index
      %c0_55 = arith.constant 0 : index
      %96 = vector.load %arg13[%c0_54, %c0_55] : memref<4x256xf32, #tpu.memory_space<vmem>>, vector<4x256xf32>
      %97 = vector.shape_cast %96 : vector<4x256xf32> to vector<1x4x256xf32>
      %cst_56 = arith.constant dense<0.000000e+00> : vector<1xf32>
      %98 = vector.multi_reduction <add>, %97, %cst_56 [1, 2] : vector<1x4x256xf32> to vector<1xf32>
      %99 = vector.shape_cast %98 : vector<1xf32> to vector<1x1x1xf32>
      %100 = vector.extract %99[0, 0, 0] : f32 from vector<1x1x1xf32>
      %101 = vector.broadcast %100 : f32 to vector<1x1xf32>
      %c0_57 = arith.constant 0 : index
      %c0_58 = arith.constant 0 : index
      %102 = vector.load %arg8[%c0_57, %c0_58] : memref<1x1xf32, #tpu.memory_space<vmem>>, vector<1x1xf32>
      tpu.vector_store %arg8[%c0_57, %c0_58], %101 {strides = array<i32>} : memref<1x1xf32, #tpu.memory_space<vmem>>, vector<1x1xf32>,
      %c0_59 = arith.constant 0 : index
      %c0_60 = arith.constant 0 : index
      %103 = vector.load %arg14[%c0_59, %c0_60] : memref<4x256xf32, #tpu.memory_space<vmem>>, vector<4x256xf32>
      %104 = vector.shape_cast %103 : vector<4x256xf32> to vector<1x4x256xf32>
      %cst_61 = arith.constant dense<0.000000e+00> : vector<1xf32>
      %105 = vector.multi_reduction <add>, %104, %cst_61 [1, 2] : vector<1x4x256xf32> to vector<1xf32>
      %106 = vector.shape_cast %105 : vector<1xf32> to vector<1x1x1xf32>
      %107 = vector.extract %106[0, 0, 0] : f32 from vector<1x1x1xf32>
      %108 = vector.broadcast %107 : f32 to vector<1x1xf32>
      %c0_62 = arith.constant 0 : index
      %c0_63 = arith.constant 0 : index
      %109 = vector.load %arg9[%c0_62, %c0_63] : memref<1x1xf32, #tpu.memory_space<vmem>>, vector<1x1xf32>
      tpu.vector_store %arg9[%c0_62, %c0_63], %108 {strides = array<i32>} : memref<1x1xf32, #tpu.memory_space<vmem>>, vector<1x1xf32>,
    } else {
    }
    return
  }
  func.func @transform_0(%arg0: i32, %arg1: i32) -> (i32, i32, i32) {
    %c0_i32 = arith.constant 0 : i32
    %c0_i32_0 = arith.constant 0 : i32
    return %arg0, %c0_i32, %arg1 : i32, i32, i32
  }
  func.func @transform_1(%arg0: i32, %arg1: i32) -> (i32, i32, i32) {
    %c0_i32 = arith.constant 0 : i32
    %c0_i32_0 = arith.constant 0 : i32
    return %arg0, %c0_i32, %arg1 : i32, i32, i32
  }
  func.func @transform_2(%arg0: i32, %arg1: i32) -> (i32, i32, i32) {
    %c0_i32 = arith.constant 0 : i32
    %c0_i32_0 = arith.constant 0 : i32
    return %arg0, %c0_i32, %arg1 : i32, i32, i32
  }
  func.func @transform_3(%arg0: i32, %arg1: i32) -> (i32, i32) {
    %c0_i32 = arith.constant 0 : i32
    %c0_i32_0 = arith.constant 0 : i32
    %c0_i32_1 = arith.constant 0 : i32
    return %c0_i32, %c0_i32_0 : i32, i32
  }
  func.func @transform_4(%arg0: i32, %arg1: i32) -> (i32, i32) {
    %c0_i32 = arith.constant 0 : i32
    %c0_i32_0 = arith.constant 0 : i32
    %c0_i32_1 = arith.constant 0 : i32
    return %c0_i32, %c0_i32_0 : i32, i32
  }
  func.func @transform_5(%arg0: i32, %arg1: i32) -> (i32, i32) {
    %c0_i32 = arith.constant 0 : i32
    %c0_i32_0 = arith.constant 0 : i32
    %c0_i32_1 = arith.constant 0 : i32
    return %c0_i32, %c0_i32_0 : i32, i32
  }
  func.func @transform_6(%arg0: i32, %arg1: i32) -> (i32, i32) {
    %c0_i32 = arith.constant 0 : i32
    %c0_i32_0 = arith.constant 0 : i32
    %c0_i32_1 = arith.constant 0 : i32
    return %c0_i32, %c0_i32_0 : i32, i32
  }
  func.func @transform_7(%arg0: i32, %arg1: i32) -> (i32, i32) {
    %c0_i32 = arith.constant 0 : i32
    %c0_i32_0 = arith.constant 0 : i32
    %c0_i32_1 = arith.constant 0 : i32
    return %c0_i32, %c0_i32_0 : i32, i32
  }
}

</mosaic_0001>

<llo_original>
// kernel: tpu_custom_call.1
$region0: #{tpu_custom_call.1}
  #allocation0 [shape = 'u32[]', space=smem, size = 0x4, offset = 0x4, fixed_abs, tag = 'smem constant byte address 0x4 - core index']
  #allocation1 [shape = 'u32[144,128]{1,0:T(1,128)}', space=vmem, size = 0x12000, scoped, tag = 'internal scratch']
  #allocation2 [shape = 'f32[4,256]{1,0:T(4,128)}', space=vmem, size = 0x1000, scoped, tag = 'scratch operand']
  #allocation3 [shape = 'f32[4,256]{1,0:T(4,128)}', space=vmem, size = 0x1000, scoped, tag = 'scratch operand']
  #allocation4 [shape = 'f32[4,256]{1,0:T(4,128)}', space=vmem, size = 0x1000, scoped, tag = 'scratch operand']
  #allocation5 [shape = 'f32[4,256]{1,0:T(4,128)}', space=vmem, size = 0x1000, scoped, tag = 'scratch operand']
  #allocation6 [shape = 'f32[4,256]{1,0:T(4,128)}', space=vmem, size = 0x1000, scoped, tag = 'scratch operand']
  %s0 = inlined_call_operand.hbm [shape: f32[2,4,256], index: 0, kind: input, shape index: {}]
  %s1 = inlined_call_operand.hbm [shape: f32[2,4,256], index: 1, kind: input, shape index: {}]
  %s2 = inlined_call_operand.vmem [shape: f32[2,1,256], index: 2, kind: input, shape index: {}]
  %s3 = inlined_call_operand.hbm [shape: f32[1,1], index: 3, kind: output, shape index: {0}]
  %s4 = inlined_call_operand.hbm [shape: f32[1,1], index: 4, kind: output, shape index: {1}]
  %s5 = inlined_call_operand.hbm [shape: f32[1,1], index: 5, kind: output, shape index: {2}]
  %s6 = inlined_call_operand.hbm [shape: f32[1,1], index: 6, kind: output, shape index: {3}]
  %s7 = inlined_call_operand.hbm [shape: f32[1,1], index: 7, kind: output, shape index: {4}]
  %8 = xla_tuple %s3, %s4, %s5, %s6, %s7
  %s9 = sld [smem:[#allocation0]]
  $region93: #{tpu_custom_call.1} parent=0
    _
  %s11 = ssub.s32 1, %s9
  %s12 = scalar_select 0, %s11, %s9
  $region1: #{tpu_custom_call.1} parent=0
    #allocation7 [shape = 'u8[8192]{0}', space=vmem, size = 0x2000, scoped, tag = 'input window, operand 0']
    #allocation8 [shape = 's32[2]{0}', space=sflag, size = 0x8, scoped, tag = 'scoped memory for tpu_custom_call.1']
    #allocation9 [shape = 's32[2]{0}', space=sflag, size = 0x8, scoped, tag = 'scoped memory for tpu_custom_call.1']
    #allocation10 [shape = 'u8[8192]{0}', space=vmem, size = 0x2000, scoped, tag = 'input window, operand 1']
    #allocation11 [shape = 's32[2]{0}', space=sflag, size = 0x8, scoped, tag = 'scoped memory for tpu_custom_call.1']
    #allocation12 [shape = 'u8[512]{0}', space=vmem, size = 0x400, scoped, tag = 'output window, operand 0, single buffered']
    #allocation13 [shape = 'u8[512]{0}', space=vmem, size = 0x400, scoped, tag = 'output window, operand 1, single buffered']
    #allocation14 [shape = 's32[1]{0}', space=sflag, size = 0x4, scoped, tag = 'scoped memory for tpu_custom_call.1']
    #allocation15 [shape = 'u8[512]{0}', space=vmem, size = 0x400, scoped, tag = 'output window, operand 2, single buffered']
    #allocation16 [shape = 'u8[512]{0}', space=vmem, size = 0x400, scoped, tag = 'output window, operand 3, single buffered']
    #allocation17 [shape = 's32[1]{0}', space=sflag, size = 0x4, scoped, tag = 'scoped memory for tpu_custom_call.1']
    #allocation18 [shape = 'u8[512]{0}', space=vmem, size = 0x400, scoped, tag = 'output window, operand 4, single buffered']
    %13 = vsyncpa [#allocation8], 0
    %s14 = scalar_lea.sflag [#allocation8], 1
    %15 = vsyncpa %s14, 0
    %16 = vsyncpa [#allocation11], 0
    %s17 = scalar_lea.sflag [#allocation11], 1
    %18 = vsyncpa %s17, 0
    %19 = vsyncpa [#allocation9], 0
    %20 = vsyncpa [#allocation14], 0
    %21 = vsyncpa [#allocation17], 0
    loop: start=0, step=1, limit=4
    $region2: #{tpu_custom_call.1} parent=1 // loop_pre_header
      _
    $region3: #{tpu_custom_call.1} parent=1 // loop_header
      %s23 = sphi 0, %s27
      %p24 = scmp.ge.s32.totalorder %s23, 4
      %s30 = sphi 0, %s42
      %s31 = sphi 0, %s38
      %s32 = sphi 0, %s30
      %s33 = sphi 0, %s31
      %s34 = sphi 0, %s32
      %s35 = sphi 0, %s33
      %s47 = sphi 0, %s49
      %s50 = sphi 0, %s47
      %s51 = sphi 0, %s50
      %s67 = sphi 0, %s51
      %s75 = sphi 0, %s77
      %s78 = sphi 0, %s75
      %s79 = sphi 0, %s78
      %s95 = sphi 0, %s79
      %s103 = sphi 0, %s105
      %s106 = sphi 0, %s103
      %s107 = sphi 0, %s106
      %s123 = sphi 0, %s107
      %s127 = sphi 0, %s127
      %s129 = sphi 0, %s127
      %s130 = sphi 0, %s129
      %s144 = sphi 0, %s130
      %s148 = sphi 0, %s148
      %s150 = sphi 0, %s148
      %s151 = sphi 0, %s150
      %s165 = sphi 0, %s151
      %s169 = sphi 0, %s169
      %s171 = sphi 0, %s169
      %s172 = sphi 0, %s171
      %s186 = sphi 0, %s172
      %s190 = sphi 0, %s190
      %s192 = sphi 0, %s190
      %s193 = sphi 0, %s192
      %s207 = sphi 0, %s193
      %s211 = sphi 0, %s211
      %s213 = sphi 0, %s211
      %s214 = sphi 0, %s213
      %s228 = sphi 0, %s214
    $region4: #{tpu_custom_call.1} parent=1 // loop_header_branch
      %26 = sbr.rel (%p24) target = $region8
    $region5: #{tpu_custom_call.1} parent=1 // loop_body
      %s28 = ssub.s32 %s23, 1
      %s29 = ssub.s32 %s23, 2
      %s36 = sadd.s32 1, %s31
      %p37 = scmp.ge.s32.totalorder %s36, 1
      %s38 = scalar_select %p37, 0, %s36
      %s39 = sadd.s32 1, %s30
      %s40 = scalar_select %p37, %s39, %s30
      %p41 = scmp.ge.s32.totalorder %s40, 2
      %s42 = scalar_select %p41, 0, %s40
      %s43 = ssub.s32 %s30, %s42
      %s44 = ssub.s32 %s31, %s38
      %s45 = sor.u32 %s43, %s44
      %p46 = scmp.eq.s32.totalorder %s45, 0
      %s48 = sadd.s32 %s47, 1
      %s49 = scalar_select %p46, %s47, %s48
      %p52 = pneg %p46
      %p53 = scmp.eq.s32.totalorder %s23, 1
      %p54 = por %p52, %p53
      %p55 = scmp.ne.s32.totalorder %s47, %s50
      %p56 = scmp.eq.s32.totalorder %s23, 0
      %p57 = por %p55, %p56
      %p58 = scmp.ne.s32.totalorder %s47, %s50
      %p59 = scmp.eq.s32.totalorder %s28, 1
      %p60 = por %p58, %p59
      %p61 = scmp.ne.s32.totalorder %s50, %s51
      %p62 = scmp.eq.s32.totalorder %s28, 0
      %p63 = por %p61, %p62
      %p64 = scmp.ne.s32.totalorder %s50, %s51
      %p65 = scmp.eq.s32.totalorder %s29, 1
      %p66 = por %p64, %p65
      %p68 = scmp.ne.s32.totalorder %s51, %s67
      %p69 = scmp.eq.s32.totalorder %s29, 0
      %p70 = por %p68, %p69
      %s71 = ssub.s32 %s30, %s42
      %s72 = ssub.s32 %s31, %s38
      %s73 = sor.u32 %s71, %s72
      %p74 = scmp.eq.s32.totalorder %s73, 0
      %s76 = sadd.s32 %s75, 1
      %s77 = scalar_select %p74, %s75, %s76
      %p80 = pneg %p74
      %p81 = scmp.eq.s32.totalorder %s23, 1
      %p82 = por %p80, %p81
      %p83 = scmp.ne.s32.totalorder %s75, %s78
      %p84 = scmp.eq.s32.totalorder %s23, 0
      %p85 = por %p83, %p84
      %p86 = scmp.ne.s32.totalorder %s75, %s78
      %p87 = scmp.eq.s32.totalorder %s28, 1
      %p88 = por %p86, %p87
      %p89 = scmp.ne.s32.totalorder %s78, %s79
      %p90 = scmp.eq.s32.totalorder %s28, 0
      %p91 = por %p89, %p90
      %p92 = scmp.ne.s32.totalorder %s78, %s79
      %p93 = scmp.eq.s32.totalorder %s29, 1
      %p94 = por %p92, %p93
      %p96 = scmp.ne.s32.totalorder %s79, %s95
      %p97 = scmp.eq.s32.totalorder %s29, 0
      %p98 = por %p96, %p97
      %s99 = ssub.s32 %s30, %s42
      %s100 = ssub.s32 %s31, %s38
      %s101 = sor.u32 %s99, %s100
      %p102 = scmp.eq.s32.totalorder %s101, 0
      %s104 = sadd.s32 %s103, 1
      %s105 = scalar_select %p102, %s103, %s104
      %p108 = pneg %p102
      %p109 = scmp.eq.s32.totalorder %s23, 1
      %p110 = por %p108, %p109
      %p111 = scmp.ne.s32.totalorder %s103, %s106
      %p112 = scmp.eq.s32.totalorder %s23, 0
      %p113 = por %p111, %p112
      %p114 = scmp.ne.s32.totalorder %s103, %s106
      %p115 = scmp.eq.s32.totalorder %s28, 1
      %p116 = por %p114, %p115
      %p117 = scmp.ne.s32.totalorder %s106, %s107
      %p118 = scmp.eq.s32.totalorder %s28, 0
      %p119 = por %p117, %p118
      %p120 = scmp.ne.s32.totalorder %s106, %s107
      %p121 = scmp.eq.s32.totalorder %s29, 1
      %p122 = por %p120, %p121
      %p124 = scmp.ne.s32.totalorder %s107, %s123
      %p125 = scmp.eq.s32.totalorder %s29, 0
      %p126 = por %p124, %p125
      %s128 = sadd.s32 %s127, 1
      %p131 = scmp.eq.s32.totalorder %s23, 1
      %p132 = scmp.ne.s32.totalorder %s127, %s129
      %p133 = scmp.eq.s32.totalorder %s23, 0
      %p134 = por %p132, %p133
      %p135 = scmp.ne.s32.totalorder %s127, %s129
      %p136 = scmp.eq.s32.totalorder %s28, 1
      %p137 = por %p135, %p136
      %p138 = scmp.ne.s32.totalorder %s129, %s130
      %p139 = scmp.eq.s32.totalorder %s28, 0
      %p140 = por %p138, %p139
      %p141 = scmp.ne.s32.totalorder %s129, %s130
      %p142 = scmp.eq.s32.totalorder %s29, 1
      %p143 = por %p141, %p142
      %p145 = scmp.ne.s32.totalorder %s130, %s144
      %p146 = scmp.eq.s32.totalorder %s29, 0
      %p147 = por %p145, %p146
      %s149 = sadd.s32 %s148, 1
      %p152 = scmp.eq.s32.totalorder %s23, 1
      %p153 = scmp.ne.s32.totalorder %s148, %s150
      %p154 = scmp.eq.s32.totalorder %s23, 0
      %p155 = por %p153, %p154
      %p156 = scmp.ne.s32.totalorder %s148, %s150
      %p157 = scmp.eq.s32.totalorder %s28, 1
      %p158 = por %p156, %p157
      %p159 = scmp.ne.s32.totalorder %s150, %s151
      %p160 = scmp.eq.s32.totalorder %s28, 0
      %p161 = por %p159, %p160
      %p162 = scmp.ne.s32.totalorder %s150, %s151
      %p163 = scmp.eq.s32.totalorder %s29, 1
      %p164 = por %p162, %p163
      %p166 = scmp.ne.s32.totalorder %s151, %s165
      %p167 = scmp.eq.s32.totalorder %s29, 0
      %p168 = por %p166, %p167
      %s170 = sadd.s32 %s169, 1
      %p173 = scmp.eq.s32.totalorder %s23, 1
      %p174 = scmp.ne.s32.totalorder %s169, %s171
      %p175 = scmp.eq.s32.totalorder %s23, 0
      %p176 = por %p174, %p175
      %p177 = scmp.ne.s32.totalorder %s169, %s171
      %p178 = scmp.eq.s32.totalorder %s28, 1
      %p179 = por %p177, %p178
      %p180 = scmp.ne.s32.totalorder %s171, %s172
      %p181 = scmp.eq.s32.totalorder %s28, 0
      %p182 = por %p180, %p181
      %p183 = scmp.ne.s32.totalorder %s171, %s172
      %p184 = scmp.eq.s32.totalorder %s29, 1
      %p185 = por %p183, %p184
      %p187 = scmp.ne.s32.totalorder %s172, %s186
      %p188 = scmp.eq.s32.totalorder %s29, 0
      %p189 = por %p187, %p188
      %s191 = sadd.s32 %s190, 1
      %p194 = scmp.eq.s32.totalorder %s23, 1
      %p195 = scmp.ne.s32.totalorder %s190, %s192
      %p196 = scmp.eq.s32.totalorder %s23, 0
      %p197 = por %p195, %p196
      %p198 = scmp.ne.s32.totalorder %s190, %s192
      %p199 = scmp.eq.s32.totalorder %s28, 1
      %p200 = por %p198, %p199
      %p201 = scmp.ne.s32.totalorder %s192, %s193
      %p202 = scmp.eq.s32.totalorder %s28, 0
      %p203 = por %p201, %p202
      %p204 = scmp.ne.s32.totalorder %s192, %s193
      %p205 = scmp.eq.s32.totalorder %s29, 1
      %p206 = por %p204, %p205
      %p208 = scmp.ne.s32.totalorder %s193, %s207
      %p209 = scmp.eq.s32.totalorder %s29, 0
      %p210 = por %p208, %p209
      %s212 = sadd.s32 %s211, 1
      %p215 = scmp.eq.s32.totalorder %s23, 1
      %p216 = scmp.ne.s32.totalorder %s211, %s213
      %p217 = scmp.eq.s32.totalorder %s23, 0
      %p218 = por %p216, %p217
      %p219 = scmp.ne.s32.totalorder %s211, %s213
      %p220 = scmp.eq.s32.totalorder %s28, 1
      %p221 = por %p219, %p220
      %p222 = scmp.ne.s32.totalorder %s213, %s214
      %p223 = scmp.eq.s32.totalorder %s28, 0
      %p224 = por %p222, %p223
      %p225 = scmp.ne.s32.totalorder %s213, %s214
      %p226 = scmp.eq.s32.totalorder %s29, 1
      %p227 = por %p225, %p226
      %p229 = scmp.ne.s32.totalorder %s214, %s228
      %p230 = scmp.eq.s32.totalorder %s29, 0
      %p231 = por %p229, %p230
      %p232 = scmp.le.s32.totalorder 1, %s23
      %p233 = scmp.lt.s32.totalorder %s23, 3
      %p234 = pnand %p232, %p233
      %p235 = pneg %p234
      // Predicated region
      $region9: #{tpu_custom_call.1} parent=5 // pred_check
        _
      $region10: #{tpu_custom_call.1} parent=5 // pred_check_branch
        %237 = sbr.rel (%p234) target = $region12
      $region11: #{tpu_custom_call.1} parent=5 // pred_region
        %s238 = ssub.s32 %s23, 1
      $region12: #{tpu_custom_call.1} parent=5 // pred_fallthru
        _
      %p239 = scmp.lt.s32.totalorder %s23, 2
      // Predicated region
      $region13: #{tpu_custom_call.1} parent=5 // pred_check
        %p240 = pneg %p239
      $region14: #{tpu_custom_call.1} parent=5 // pred_check_branch
        %242 = sbr.rel (%p240) target = $region16
      $region15: #{tpu_custom_call.1} parent=5 // pred_region
        // Predicated region
        $region17: #{tpu_custom_call.1} parent=15 // pred_check
          %p243 = pneg %p57
        $region18: #{tpu_custom_call.1} parent=15 // pred_check_branch
          %245 = sbr.rel (%p243) target = $region20
        $region19: #{tpu_custom_call.1} parent=15 // pred_region
          %s246 = sand.u32 %s47, 1
          %s247 = scalar_lea.sflag [#allocation8], %s246
          %s248 = sand.u32 %s47, 1
          %s249 = smul.addr %s248, 8
          %s250 = scalar_lea.vmem [#allocation7], %s249
          %s251 = smul.u32 2, %s31
          %s253 = ssub.s32 128, 128
          %254 = vsyncadd %s247, %s253
          %s255 = smul.addr %s30, 2
          %s256 = sadd.s32 %s251, %s255
          %s257 = smul.addr %s256, 64
          %s258 = scalar_lea.hbm %s0, %s257
          %s260 = sshll.u32 %s250, 4
          %s261 = int_to_ptr.vmem [resolvable:$true] %s260
          %263 = dma.hbm_to_vmem [thread:$0]  %s258, 128, %s261, %s247
        $region20: #{tpu_custom_call.1} parent=15 // pred_fallthru
          _
        // Predicated region
        $region21: #{tpu_custom_call.1} parent=15 // pred_check
          %p264 = pneg %p85
        $region22: #{tpu_custom_call.1} parent=15 // pred_check_branch
          %266 = sbr.rel (%p264) target = $region24
        $region23: #{tpu_custom_call.1} parent=15 // pred_region
          %s267 = sand.u32 %s75, 1
          %s268 = scalar_lea.sflag [#allocation11], %s267
          %s269 = sand.u32 %s75, 1
          %s270 = smul.addr %s269, 8
          %s271 = scalar_lea.vmem [#allocation10], %s270
          %s272 = smul.u32 2, %s31
          %s274 = ssub.s32 128, 128
          %275 = vsyncadd %s268, %s274
          %s276 = smul.addr %s30, 2
          %s277 = sadd.s32 %s272, %s276
          %s278 = smul.addr %s277, 64
          %s279 = scalar_lea.hbm %s1, %s278
          %s281 = sshll.u32 %s271, 4
          %s282 = int_to_ptr.vmem [resolvable:$true] %s281
          %284 = dma.hbm_to_vmem [thread:$0]  %s279, 128, %s282, %s268
        $region24: #{tpu_custom_call.1} parent=15 // pred_fallthru
          _
        // Predicated region
        $region25: #{tpu_custom_call.1} parent=15 // pred_check
          %p285 = pneg %p113
        $region26: #{tpu_custom_call.1} parent=15 // pred_check_branch
          %287 = sbr.rel (%p285) target = $region28
        $region27: #{tpu_custom_call.1} parent=15 // pred_region
          %s288 = smul.u32 2, %s31
          %p289 = scmp.lt.s32.totalorder %s30, 1
          %s290 = scalar_select %p289, %s30, 1
          %p291 = scmp.lt.s32.totalorder %s288, 1
          %s292 = scalar_select %p291, %s288, 1
          %s293 = smul.addr %s290, 2
          %s294 = sadd.s32 %s292, %s293
          %s295 = scalar_lea.vmem %s2, %s294
          %s296 = smul.u32 2, %s31
        $region28: #{tpu_custom_call.1} parent=15 // pred_fallthru
          _
      $region16: #{tpu_custom_call.1} parent=5 // pred_fallthru
        _
      %p297 = scmp.le.s32.totalorder 1, %s23
      %p298 = scmp.lt.s32.totalorder %s23, 3
      %p299 = pnand %p297, %p298
      %p300 = pneg %p299
      // Predicated region
      $region29: #{tpu_custom_call.1} parent=5 // pred_check
        _
      $region30: #{tpu_custom_call.1} parent=5 // pred_check_branch
        %302 = sbr.rel (%p299) target = $region32
      $region31: #{tpu_custom_call.1} parent=5 // pred_region
        %s303 = ssub.s32 %s23, 1
        %s304 = sand.u32 %s50, 1
        %s305 = scalar_lea.sflag [#allocation8], %s304
        %s306 = sand.u32 %s50, 1
        %s307 = smul.addr %s306, 8
        %s308 = scalar_lea.vmem [#allocation7], %s307
        // Predicated region
        $region33: #{tpu_custom_call.1} parent=31 // pred_check
          %p309 = pneg %p63
        $region34: #{tpu_custom_call.1} parent=31 // pred_check_branch
          %311 = sbr.rel (%p309) target = $region36
        $region35: #{tpu_custom_call.1} parent=31 // pred_region
          %312 = dma.done %s305, 128
        $region36: #{tpu_custom_call.1} parent=31 // pred_fallthru
          _
        %s313 = sand.u32 %s78, 1
        %s314 = scalar_lea.sflag [#allocation11], %s313
        %s315 = sand.u32 %s78, 1
        %s316 = smul.addr %s315, 8
        %s317 = scalar_lea.vmem [#allocation10], %s316
        // Predicated region
        $region37: #{tpu_custom_call.1} parent=31 // pred_check
          %p318 = pneg %p91
        $region38: #{tpu_custom_call.1} parent=31 // pred_check_branch
          %320 = sbr.rel (%p318) target = $region40
        $region39: #{tpu_custom_call.1} parent=31 // pred_region
          %321 = dma.done %s314, 128
        $region40: #{tpu_custom_call.1} parent=31 // pred_fallthru
          _
        %s322 = sand.u32 %s50, 1
        %s323 = scalar_lea.sflag [#allocation8], %s322
        %s324 = sand.u32 %s50, 1
        %s325 = smul.addr %s324, 8
        %s326 = scalar_lea.vmem [#allocation7], %s325
        %p327 = pneg %p63
        %p328 = pneg %p60
        %s329 = sand.u32 %s78, 1
        %s330 = scalar_lea.sflag [#allocation11], %s329
        %s331 = sand.u32 %s78, 1
        %s332 = smul.addr %s331, 8
        %s333 = scalar_lea.vmem [#allocation10], %s332
        %p334 = pneg %p91
        %p335 = pneg %p88
        %s336 = smul.u32 2, %s33
        %p337 = scmp.lt.s32.totalorder %s32, 1
        %s338 = scalar_select %p337, %s32, 1
        %p339 = scmp.lt.s32.totalorder %s336, 1
        %s340 = scalar_select %p339, %s336, 1
        %s341 = smul.addr %s338, 2
        %s342 = sadd.s32 %s340, %s341
        %s343 = scalar_lea.vmem %s2, %s342
        %p344 = pneg %p119
        %p345 = pneg %p116
        %p346 = pneg %p140
        %p347 = pneg %p137
        %p348 = pneg %p161
        %p349 = pneg %p158
        %p350 = pneg %p182
        %p351 = pneg %p179
        %p352 = pneg %p203
        %p353 = pneg %p200
        %p354 = pneg %p224
        %p355 = pneg %p221
        %s356 = smul.u32 2, %s33
        %s357 = smul.u32 2, %s33
        %s358 = smul.u32 2, %s33
        %p359 = scmp.lt.s32.totalorder %s32, 1
        %s360 = scalar_select %p359, %s32, 1
        %p361 = scmp.lt.s32.totalorder %s358, 1
        %s362 = scalar_select %p361, %s358, 1
        %s363 = smul.addr %s360, 2
        %s364 = sadd.s32 %s362, %s363
        %s365 = scalar_lea.vmem %s2, %s364
        %s366 = smul.u32 2, %s33
        %p367 = scmp.eq.s32.totalorder %s32, 0
        %p368 = scmp.eq.s32.totalorder %s33, 0
        %p369 = pnand %p367, %p368
        %p370 = pneg %p369
        // Predicated region
        $region41: #{tpu_custom_call.1} parent=31 // pred_check
          _
        $region42: #{tpu_custom_call.1} parent=31 // pred_check_branch
          %372 = sbr.rel (%p369) target = $region44
        $region43: #{tpu_custom_call.1} parent=31 // pred_region
          %373 = vst [vmem:[#allocation2] sm:$0xff] 0.0
          %374 = vst [vmem:[#allocation3] sm:$0xff] 0.0
          %375 = vst [vmem:[#allocation4] sm:$0xff] 0.0
          %376 = vst [vmem:[#allocation5] sm:$0xff] 0.0
          %377 = vst [vmem:[#allocation6] sm:$0xff] 0.0
        $region44: #{tpu_custom_call.1} parent=31 // pred_fallthru
          _
        %v378 = vld [vmem:[%s308] sm:$0xff]
        %v379 = vld [vmem:[%s317] sm:$0xff]
        %v380 = vld [vmem:[%s365] sm:$0x3]
        %v381 = vand.u32 2147483647, %v378
        %v382 = vsub.f32 0.0, %v381
        %v383 = vmul.f32 %v382, 1.442695
        %v384 = vpow.pop %v383
        %v385 = vadd.f32 %v384, 1.0
        %v386 = vlog2.pop %v385
        %v387 = vmul.f32 %v386, 0.6931472
        %v388 = vmul.f32 -0.5, %v384
        %v389 = vadd.f32 %v388, 1.0
        %v390 = vmul.f32 %v389, %v384
        %v391 = vand.u32 2147483647, %v384
        %vm392 = vcmp.lt.f32.partialorder %v391, 0.0004427343
        %v393 = vsel %vm392, %v390, %v387
        %v394 = vmax.f32 %v378, 0.0
        %v395 = vadd.f32 %v384, 1.0
        %v396 = vrcp.pop %v395
        %vm397 = vcmp.ge.f32.partialorder %v378, 0.0
        %v398 = vmul.f32 %v384, %v396
        %v399 = vsel %vm397, %v396, %v398
        %v400 = vand.u32 2147483647, %v379
        %v401 = vsub.f32 0.0, %v400
        %v402 = vmul.f32 %v401, 1.442695
        %v403 = vpow.pop %v402
        %v404 = vadd.f32 %v403, 1.0
        %v405 = vlog2.pop %v404
        %v406 = vmul.f32 %v405, 0.6931472
        %v407 = vmul.f32 -0.5, %v403
        %v408 = vadd.f32 %v407, 1.0
        %v409 = vmul.f32 %v408, %v403
        %v410 = vand.u32 2147483647, %v403
        %vm411 = vcmp.lt.f32.partialorder %v410, 0.0004427343
        %v412 = vsel %vm411, %v409, %v406
        %v413 = vmax.f32 %v379, 0.0
        %v414 = vadd.f32 %v403, 1.0
        %v415 = vrcp.pop %v414
        %vm416 = vcmp.ge.f32.partialorder %v379, 0.0
        %v417 = vmul.f32 %v403, %v415
        %v418 = vsel %vm416, %v415, %v417
        %v420 = vlaneseq
        %v421 = vshrl.u32 %v420, 7
        %v422 = vsub.s32 0, %v421
        %v423 = vrot.slane %v380, %v422
        %v424 = vlaneseq
        %v425 = vshrl.u32 %v424, 7
        %v426 = vsub.s32 1, %v425
        %v427 = vrot.slane %v380, %v426
        %v428 = vcombine.low %v423, %v427
        %v430 = vmul.f32 %v378, %v428
        %v431 = vsub.f32 %v394, %v430
        %v432 = vadd.f32 %v431, %v393
        %v433 = vmul.f32 %v379, %v428
        %v434 = vsub.f32 %v413, %v433
        %v435 = vadd.f32 %v434, %v412
        %v436 = vsub.f32 %v418, %v399
        %v437 = vmul.f32 %v436, %v436
        %v438 = vmul.f32 %v378, %v399
        %v439 = vsub.f32 %v394, %v438
        %v440 = vadd.f32 %v439, %v393
        %v441 = vmul.f32 %v379, %v418
        %v442 = vsub.f32 %v413, %v441
        %v443 = vadd.f32 %v442, %v412
        %v444 = vld [vmem:[#allocation2] sm:$0xff]
        %v445 = vadd.f32 %v444, %v432
        %446 = vst [vmem:[#allocation2] sm:$0xff] %v445
        %v447 = vld [vmem:[#allocation3] sm:$0xff]
        %v448 = vadd.f32 %v447, %v435
        %449 = vst [vmem:[#allocation3] sm:$0xff] %v448
        %v450 = vld [vmem:[#allocation4] sm:$0xff]
        %v451 = vadd.f32 %v450, %v437
        %452 = vst [vmem:[#allocation4] sm:$0xff] %v451
        %v453 = vld [vmem:[#allocation5] sm:$0xff]
        %v454 = vadd.f32 %v453, %v440
        %455 = vst [vmem:[#allocation5] sm:$0xff] %v454
        %v456 = vld [vmem:[#allocation6] sm:$0xff]
        %v457 = vadd.f32 %v456, %v443
        %458 = vst [vmem:[#allocation6] sm:$0xff] %v457
        %p459 = scmp.eq.s32.totalorder %s32, 1
        %p460 = pnand %p459, %p368
        %p461 = pneg %p460
        // Predicated region
        $region45: #{tpu_custom_call.1} parent=31 // pred_check
          _
        $region46: #{tpu_custom_call.1} parent=31 // pred_check_branch
          %463 = sbr.rel (%p460) target = $region48
        $region47: #{tpu_custom_call.1} parent=31 // pred_region
          %v464 = vld [vmem:[#allocation2] sm:$0xff]
          %v466 = vcombine.high %v464, %v464
          %vm468 = vcmask 1043456
          %v469 = vsel %vm468, %v464, 0.0
          %v470 = vsel %vm468, %v466, 0.0
          %v471 = vadd.f32 %v469, %v470
          %472 = vadd.xlane.f32.xlu0 %v471
          %v473 = vpop.xlane.xlu0 %472
          %v474 = vrot.slane %v473, 4
          %v475 = vadd.f32 %v473, %v474
          %v476 = vrot.slane %v475, 2
          %v477 = vadd.f32 %v475, %v476
          %v478 = vrot.slane %v477, 1
          %v479 = vadd.f32 %v477, %v478
          %s480 = vtos %v479
          %v481 = vstv %s480
          %vm482 = vcmask 0
          %483 = vst.msk [vmem:[#allocation12] sm:$0x1] %vm482, %v481
          %v484 = vld [vmem:[#allocation3] sm:$0xff]
          %v486 = vcombine.high %v484, %v484
          %v488 = vsel %vm468, %v484, 0.0
          %v489 = vsel %vm468, %v486, 0.0
          %v490 = vadd.f32 %v488, %v489
          %491 = vadd.xlane.f32.xlu0 %v490
          %v492 = vpop.xlane.xlu0 %491
          %v493 = vrot.slane %v492, 4
          %v494 = vadd.f32 %v492, %v493
          %v495 = vrot.slane %v494, 2
          %v496 = vadd.f32 %v494, %v495
          %v497 = vrot.slane %v496, 1
          %v498 = vadd.f32 %v496, %v497
          %s499 = vtos %v498
          %v500 = vstv %s499
          %501 = vst.msk [vmem:[#allocation13] sm:$0x1] %vm482, %v500
          %v502 = vld [vmem:[#allocation4] sm:$0xff]
          %v504 = vcombine.high %v502, %v502
          %v506 = vsel %vm468, %v502, 0.0
          %v507 = vsel %vm468, %v504, 0.0
          %v508 = vadd.f32 %v506, %v507
          %509 = vadd.xlane.f32.xlu0 %v508
          %v510 = vpop.xlane.xlu0 %509
          %v511 = vrot.slane %v510, 4
          %v512 = vadd.f32 %v510, %v511
          %v513 = vrot.slane %v512, 2
          %v514 = vadd.f32 %v512, %v513
          %v515 = vrot.slane %v514, 1
          %v516 = vadd.f32 %v514, %v515
          %s517 = vtos %v516
          %v518 = vstv %s517
          %519 = vst.msk [vmem:[#allocation15] sm:$0x1] %vm482, %v518
          %v520 = vld [vmem:[#allocation5] sm:$0xff]
          %v522 = vcombine.high %v520, %v520
          %v524 = vsel %vm468, %v520, 0.0
          %v525 = vsel %vm468, %v522, 0.0
          %v526 = vadd.f32 %v524, %v525
          %527 = vadd.xlane.f32.xlu0 %v526
          %v528 = vpop.xlane.xlu0 %527
          %v529 = vrot.slane %v528, 4
          %v530 = vadd.f32 %v528, %v529
          %v531 = vrot.slane %v530, 2
          %v532 = vadd.f32 %v530, %v531
          %v533 = vrot.slane %v532, 1
          %v534 = vadd.f32 %v532, %v533
          %s535 = vtos %v534
          %v536 = vstv %s535
          %537 = vst.msk [vmem:[#allocation16] sm:$0x1] %vm482, %v536
          %v538 = vld [vmem:[#allocation6] sm:$0xff]
          %v540 = vcombine.high %v538, %v538
          %v542 = vsel %vm468, %v538, 0.0
          %v543 = vsel %vm468, %v540, 0.0
          %v544 = vadd.f32 %v542, %v543
          %545 = vadd.xlane.f32.xlu0 %v544
          %v546 = vpop.xlane.xlu0 %545
          %v547 = vrot.slane %v546, 4
          %v548 = vadd.f32 %v546, %v547
          %v549 = vrot.slane %v548, 2
          %v550 = vadd.f32 %v548, %v549
          %v551 = vrot.slane %v550, 1
          %v552 = vadd.f32 %v550, %v551
          %s553 = vtos %v552
          %v554 = vstv %s553
          %555 = vst.msk [vmem:[#allocation18] sm:$0x1] %vm482, %v554
        $region48: #{tpu_custom_call.1} parent=31 // pred_fallthru
          _
        // Predicated region
        $region49: #{tpu_custom_call.1} parent=31 // pred_check
          %p556 = pneg %p137
        $region50: #{tpu_custom_call.1} parent=31 // pred_check_branch
          %558 = sbr.rel (%p556) target = $region52
        $region51: #{tpu_custom_call.1} parent=31 // pred_region
          %s560 = ssub.s32 16, 16
          %561 = vsyncadd [#allocation9], %s560
          %s563 = sshll.u32 [#allocation12], 4
          %s564 = int_to_ptr.vmem [resolvable:$true] %s563
          %566 = dma.vmem_to_hbm [thread:$0]  %s564, 16, %s3, [#allocation9]
        $region52: #{tpu_custom_call.1} parent=31 // pred_fallthru
          _
        // Predicated region
        $region53: #{tpu_custom_call.1} parent=31 // pred_check
          %p567 = pneg %p158
        $region54: #{tpu_custom_call.1} parent=31 // pred_check_branch
          %569 = sbr.rel (%p567) target = $region56
        $region55: #{tpu_custom_call.1} parent=31 // pred_region
          %s571 = ssub.s32 16, 16
          %572 = vsyncadd [#allocation14], %s571
          %s574 = sshll.u32 [#allocation13], 4
          %s575 = int_to_ptr.vmem [resolvable:$true] %s574
          %577 = dma.vmem_to_hbm [thread:$0]  %s575, 16, %s4, [#allocation14]
        $region56: #{tpu_custom_call.1} parent=31 // pred_fallthru
          _
        // Predicated region
        $region57: #{tpu_custom_call.1} parent=31 // pred_check
          %p578 = pneg %p179
        $region58: #{tpu_custom_call.1} parent=31 // pred_check_branch
          %580 = sbr.rel (%p578) target = $region60
        $region59: #{tpu_custom_call.1} parent=31 // pred_region
          %s582 = ssub.s32 16, 16
          %583 = vsyncadd [#allocation14], %s582
          %s585 = sshll.u32 [#allocation15], 4
          %s586 = int_to_ptr.vmem [resolvable:$true] %s585
          %588 = dma.vmem_to_hbm [thread:$0]  %s586, 16, %s5, [#allocation14]
        $region60: #{tpu_custom_call.1} parent=31 // pred_fallthru
          _
        // Predicated region
        $region61: #{tpu_custom_call.1} parent=31 // pred_check
          %p589 = pneg %p200
        $region62: #{tpu_custom_call.1} parent=31 // pred_check_branch
          %591 = sbr.rel (%p589) target = $region64
        $region63: #{tpu_custom_call.1} parent=31 // pred_region
          %s593 = ssub.s32 16, 16
          %594 = vsyncadd [#allocation17], %s593
          %s596 = sshll.u32 [#allocation16], 4
          %s597 = int_to_ptr.vmem [resolvable:$true] %s596
          %599 = dma.vmem_to_hbm [thread:$0]  %s597, 16, %s6, [#allocation17]
        $region64: #{tpu_custom_call.1} parent=31 // pred_fallthru
          _
        // Predicated region
        $region65: #{tpu_custom_call.1} parent=31 // pred_check
          %p600 = pneg %p221
        $region66: #{tpu_custom_call.1} parent=31 // pred_check_branch
          %602 = sbr.rel (%p600) target = $region68
        $region67: #{tpu_custom_call.1} parent=31 // pred_region
          %s604 = ssub.s32 16, 16
          %605 = vsyncadd [#allocation17], %s604
          %s607 = sshll.u32 [#allocation18], 4
          %s608 = int_to_ptr.vmem [resolvable:$true] %s607
          %610 = dma.vmem_to_hbm [thread:$0]  %s608, 16, %s7, [#allocation17]
        $region68: #{tpu_custom_call.1} parent=31 // pred_fallthru
          _
        // Predicated region
        $region69: #{tpu_custom_call.1} parent=31 // pred_check
          %p611 = pneg %p137
        $region70: #{tpu_custom_call.1} parent=31 // pred_check_branch
          %613 = sbr.rel (%p611) target = $region72
        $region71: #{tpu_custom_call.1} parent=31 // pred_region
          %614 = dma.done [#allocation9], 16
        $region72: #{tpu_custom_call.1} parent=31 // pred_fallthru
          _
        // Predicated region
        $region73: #{tpu_custom_call.1} parent=31 // pred_check
          %p615 = pneg %p158
        $region74: #{tpu_custom_call.1} parent=31 // pred_check_branch
          %617 = sbr.rel (%p615) target = $region76
        $region75: #{tpu_custom_call.1} parent=31 // pred_region
          %618 = dma.done [#allocation14], 16
        $region76: #{tpu_custom_call.1} parent=31 // pred_fallthru
          _
        // Predicated region
        $region77: #{tpu_custom_call.1} parent=31 // pred_check
          %p619 = pneg %p179
        $region78: #{tpu_custom_call.1} parent=31 // pred_check_branch
          %621 = sbr.rel (%p619) target = $region80
        $region79: #{tpu_custom_call.1} parent=31 // pred_region
          %622 = dma.done [#allocation14], 16
        $region80: #{tpu_custom_call.1} parent=31 // pred_fallthru
          _
        // Predicated region
        $region81: #{tpu_custom_call.1} parent=31 // pred_check
          %p623 = pneg %p200
        $region82: #{tpu_custom_call.1} parent=31 // pred_check_branch
          %625 = sbr.rel (%p623) target = $region84
        $region83: #{tpu_custom_call.1} parent=31 // pred_region
          %626 = dma.done [#allocation17], 16
        $region84: #{tpu_custom_call.1} parent=31 // pred_fallthru
          _
        // Predicated region
        $region85: #{tpu_custom_call.1} parent=31 // pred_check
          %p627 = pneg %p221
        $region86: #{tpu_custom_call.1} parent=31 // pred_check_branch
          %629 = sbr.rel (%p627) target = $region88
        $region87: #{tpu_custom_call.1} parent=31 // pred_region
          %630 = dma.done [#allocation17], 16
        $region88: #{tpu_custom_call.1} parent=31 // pred_fallthru
          _
      $region32: #{tpu_custom_call.1} parent=5 // pred_fallthru
        _
      %p631 = scmp.le.s32.totalorder 2, %s23
      // Predicated region
      $region89: #{tpu_custom_call.1} parent=5 // pred_check
        %p632 = pneg %p631
      $region90: #{tpu_custom_call.1} parent=5 // pred_check_branch
        %634 = sbr.rel (%p632) target = $region92
      $region91: #{tpu_custom_call.1} parent=5 // pred_region
        %s635 = ssub.s32 %s23, 2
      $region92: #{tpu_custom_call.1} parent=5 // pred_fallthru
        _
    $region6: #{tpu_custom_call.1} parent=1 // loop_footer
      %s27 = sadd.s32 1, %s23
    $region7: #{tpu_custom_call.1} parent=1 // loop_footer_branch
      %22 = sbr.rel target = $region3
    $region8: #{tpu_custom_call.1} parent=1 // loop_exit
      _
    %636 = vsyncpa [#allocation8], 1
    %s637 = scalar_lea.sflag [#allocation8], 1
    %638 = vsyncpa %s637, 1
    %639 = vsyncpa [#allocation11], 1
    %s640 = scalar_lea.sflag [#allocation11], 1
    %641 = vsyncpa %s640, 1
    %642 = vsyncpa [#allocation9], 1
    %s643 = scalar_lea.sflag [#allocation9], 1
    %644 = vsyncpa %s643, 1
    %645 = vsyncpa [#allocation14], 1
    %646 = vsyncpa [#allocation17], 1

</llo_original>
